<compile_context>
chip_gen: v7x
topology: tpu7x:2x2x1
jax: 0.10.0
libtpu: 0.0.40
codegen_flags: <defaults>
</compile_context>

<pallas_src>
import functools

import jax
import jax.numpy as jnp
from jax import lax
from jax.experimental import pallas as pl
from jax.experimental.pallas import tpu as pltpu

# Layer sizes from the PyTorch module.
DIMS = (32, 64, 128, 256, 128, 32)

# 128-aligned lane offsets of each bias inside the concatenated bias array.
_B_OFFS = (0, 128, 256, 512, 640)
_B_TOTAL = 672

# Rows per inner sub-block (keeps the widest live f32 tile at (128, 256)).
_SUB_ROWS = 128


def _round_up(n, m):
    return ((n + m - 1) // m) * m


# --------------------------------------------------------------------------
# Kernel
# --------------------------------------------------------------------------
def _vpose_mlp_kernel(x_ref, w1_ref, w2_ref, w3_ref, w4_ref, w5_ref, b_ref,
                      o_ref, *, sub):
    w_refs = (w1_ref, w2_ref, w3_ref, w4_ref, w5_ref)
    # Hoist the (tiny) bias loads out of the sub-block loop; each is (1, out).
    biases = tuple(
        b_ref[:, _B_OFFS[l]:_B_OFFS[l] + DIMS[l + 1]] for l in range(5))

    def compute_rows(row0, rows):
        # Activations fed to the MXU are bf16; accumulation / bias / ReLU f32.
        h = x_ref[pl.ds(row0, rows), :].astype(jnp.bfloat16)
        for l in range(5):
            h = jnp.dot(h, w_refs[l][...],
                        preferred_element_type=jnp.float32) + biases[l]
            if l < 4:
                # ReLU in f32 (v5e has no bf16 VALU), then keep the live
                # inter-layer value in bf16 to halve vreg pressure.
                h = jnp.maximum(h, 0.0).astype(jnp.bfloat16)
        o_ref[pl.ds(row0, rows), :] = h.astype(o_ref.dtype)

    tm = x_ref.shape[0]
    n_full = tm // sub
    rem = tm - n_full * sub

    if n_full > 0:
        def body(r, carry):
            compute_rows(pl.multiple_of(r * sub, sub), sub)
            return carry
        lax.fori_loop(0, n_full, body, 0, unroll=True)
    if rem:
        compute_rows(n_full * sub, rem)


# --------------------------------------------------------------------------
# Wrapper
# --------------------------------------------------------------------------
def _tpu_generation():
    try:
        kind = jax.devices()[0].device_kind.lower()
    except Exception:
        return 0
    for tag, gen in (("v7", 7), ("tpu7", 7), ("7x", 7),
                     ("v6", 6), ("trillium", 6),
                     ("v5", 5)):
        if tag in kind:
            return gen
    return 0


def _default_tm(batch):
    """Batch tile: big enough to amortize grid-step overhead, capped at 512.

    On v7x ensure >= 2 grid steps so both TensorCores are used.
    """
    b8 = _round_up(max(batch, 1), 8)
    cap = 512
    if _tpu_generation() >= 7 and b8 > 128:
        tm = min(cap, _round_up((b8 + 1) // 2, 8))
    else:
        tm = min(cap, b8)
    return max(8, tm)


def prepare_params(params):
    """One-time conversion of [(W(in,out) f32, b)] into kernel arguments.

    Returns (w1..w5 bf16, bcat f32(1, 672)). Call once, reuse across calls,
    so no per-call weight cast / reshape / extra HBM round-trip.
    """
    assert len(params) == 5
    ws = []
    bcat = jnp.zeros((1, _B_TOTAL), jnp.float32)
    for l, (w, b) in enumerate(params):
        assert w.shape == (DIMS[l], DIMS[l + 1]), (l, w.shape)
        ws.append(jnp.asarray(w, jnp.bfloat16))
        b = jnp.asarray(b, jnp.float32).reshape(1, -1)
        assert b.shape == (1, DIMS[l + 1]), (l, b.shape)
        bcat = bcat.at[:, _B_OFFS[l]:_B_OFFS[l] + DIMS[l + 1]].set(b)
    return tuple(ws) + (bcat,)


def vpose_mlp(x, prepared, *, tm=None):
    """x: (B, 32) float32. prepared: output of prepare_params()."""
    B, d_in = x.shape
    assert d_in == DIMS[0]
    if tm is None:
        tm = _default_tm(B)
    # Satisfy the (8, 128) block rule: tile rows multiple of 8 (or == B).
    if tm != B and tm % 8 != 0:
        tm = _round_up(tm, 8)
    tm = min(tm, _round_up(B, 8))
    sub = min(_SUB_ROWS, tm)
    nb = pl.cdiv(B, tm)

    w1, w2, w3, w4, w5, bcat = prepared

    def const_spec(shape):
        # Whole-array block, constant index -> DMA'd once, VMEM-resident
        # across every batch-grid step.
        return pl.BlockSpec(shape, lambda i: (0, 0))

    in_specs = ([pl.BlockSpec((tm, DIMS[0]), lambda i: (i, 0))]
                + [const_spec(w.shape) for w in (w1, w2, w3, w4, w5)]
                + [const_spec(bcat.shape)])

    flops_per_row = 2 * sum(DIMS[l] * DIMS[l + 1] for l in range(5))
    bytes_weights = 2 * sum(DIMS[l] * DIMS[l + 1] for l in range(5))
    cost = pl.CostEstimate(
        flops=B * flops_per_row,
        transcendentals=0,
        bytes_accessed=B * (DIMS[0] + DIMS[-1]) * 4 + bytes_weights + _B_TOTAL * 4,
    )

    return pl.pallas_call(
        functools.partial(_vpose_mlp_kernel, sub=sub),
        out_shape=jax.ShapeDtypeStruct((B, DIMS[-1]), jnp.float32),
        grid_spec=pltpu.PrefetchScalarGridSpec(
            num_scalar_prefetch=0,
            grid=(nb,),
            in_specs=in_specs,
            out_specs=pl.BlockSpec((tm, DIMS[-1]), lambda i: (i, 0)),
        ),
        compiler_params=pltpu.CompilerParams(
            dimension_semantics=("parallel",)),  # megacore sharding on v7x
        cost_estimate=cost,
    )(x, w1, w2, w3, w4, w5, bcat)


# --------------------------------------------------------------------------
# Init / references
# --------------------------------------------------------------------------
def init_params(key):
    """Matches nn.Linear's default U(-1/sqrt(fan_in), +1/sqrt(fan_in)) init."""
    params = []
    for i in range(len(DIMS) - 1):
        fan_in, fan_out = DIMS[i], DIMS[i + 1]
        key, kw, kb = jax.random.split(key, 3)
        bound = 1.0 / jnp.sqrt(fan_in)
        w = jax.random.uniform(kw, (fan_in, fan_out), jnp.float32, -bound, bound)
        b = jax.random.uniform(kb, (1, fan_out), jnp.float32, -bound, bound)
        params.append((w, b))
    return params


def vpose_mlp_ref_f32(x, params):
    """Pure-f32 reference (original PyTorch semantics)."""
    h = x
    for i, (w, b) in enumerate(params):
        h = h @ w + b
        if i < len(params) - 1:
            h = jnp.maximum(h, 0.0)
    return h


def vpose_mlp_ref_matched(x, params):
    """Reference matching the kernel's bf16-operand / f32-accumulate math."""
    h = x.astype(jnp.bfloat16)
    for i, (w, b) in enumerate(params):
        h = jnp.dot(h, w.astype(jnp.bfloat16),
                    preferred_element_type=jnp.float32) + b.astype(jnp.float32)
        if i < len(params) - 1:
            h = jnp.maximum(h, 0.0).astype(jnp.bfloat16)
    return h.astype(jnp.float32)


# --------------------------------------------------------------------------
# Test
# --------------------------------------------------------------------------
if __name__ == "__main__":
    key = jax.random.PRNGKey(0)
    key, kx1, kx2 = jax.random.split(key, 3)
    params = init_params(key)
    prepared = prepare_params(params)  # one-time param conversion

    # Test 1: small batch, explicit small tile -> 2 grid steps + ragged tail.
    B1 = 20
    x1 = jax.random.normal(kx1, (B1, DIMS[0]), jnp.float32)
    out1 = vpose_mlp(x1, prepared, tm=16)
    jax.block_until_ready(out1)
    assert out1.shape == (B1, DIMS[-1]), out1.shape

    ref1 = vpose_mlp_ref_matched(x1, params)
    assert jnp.allclose(out1, ref1, atol=2e-2, rtol=2e-2), float(
        jnp.max(jnp.abs(out1 - ref1)))
    ref1_f32 = vpose_mlp_ref_f32(x1, params)
    assert jnp.allclose(out1, ref1_f32, atol=1e-1, rtol=1e-1), float(
        jnp.max(jnp.abs(out1 - ref1_f32)))

    # Test 2: default tiling path (exercises the in-kernel sub-block loop /
    # remainder handling, and the >=2-tile megacore path on v7x).
    B2 = 160
    x2 = jax.random.normal(kx2, (B2, DIMS[0]), jnp.float32)
    out2 = vpose_mlp(x2, prepared)
    jax.block_until_ready(out2)
    assert out2.shape == (B2, DIMS[-1]), out2.shape

    ref2 = vpose_mlp_ref_matched(x2, params)
    assert jnp.allclose(out2, ref2, atol=2e-2, rtol=2e-2), float(
        jnp.max(jnp.abs(out2 - ref2)))
    ref2_f32 = vpose_mlp_ref_f32(x2, params)
    assert jnp.allclose(out2, ref2_f32, atol=1e-1, rtol=1e-1), float(
        jnp.max(jnp.abs(out2 - ref2_f32)))

    print("KERNEL_OK")
</pallas_src>

<mosaic_0001>
module attributes {stable_mosaic.version = 11 : i64} {
  func.func @_vpose_mlp_kernel(%arg0: i32, %arg1: memref<16x32xf32, #tpu.memory_space<vmem>>, %arg2: memref<32x64xbf16, #tpu.memory_space<vmem>>, %arg3: memref<64x128xbf16, #tpu.memory_space<vmem>>, %arg4: memref<128x256xbf16, #tpu.memory_space<vmem>>, %arg5: memref<256x128xbf16, #tpu.memory_space<vmem>>, %arg6: memref<128x32xbf16, #tpu.memory_space<vmem>>, %arg7: memref<1x672xf32, #tpu.memory_space<vmem>>, %arg8: memref<16x32xf32, #tpu.memory_space<vmem>>) attributes {dimension_semantics = [#tpu.dimension_semantics<parallel>], iteration_bounds = array<i64: 2>, scalar_prefetch = 0 : i64, scratch_operands = 0 : i64, tpu.core_type = #tpu.core_type<tc>, window_params = [{transform_indices = @transform_0, window_bounds = array<i64: 16, 32>}, {pipeline_mode = #tpu.pipeline_mode<synchronous>, transform_indices = @transform_1, window_bounds = array<i64: 32, 64>}, {pipeline_mode = #tpu.pipeline_mode<synchronous>, transform_indices = @transform_2, window_bounds = array<i64: 64, 128>}, {pipeline_mode = #tpu.pipeline_mode<synchronous>, transform_indices = @transform_3, window_bounds = array<i64: 128, 256>}, {pipeline_mode = #tpu.pipeline_mode<synchronous>, transform_indices = @transform_4, window_bounds = array<i64: 256, 128>}, {pipeline_mode = #tpu.pipeline_mode<synchronous>, transform_indices = @transform_5, window_bounds = array<i64: 128, 32>}, {pipeline_mode = #tpu.pipeline_mode<synchronous>, transform_indices = @transform_6, window_bounds = array<i64: 1, 672>}, {transform_indices = @transform_7, window_bounds = array<i64: 16, 32>}]} {
    %c0 = arith.constant 0 : index
    %c0_0 = arith.constant 0 : index
    %0 = vector.load %arg7[%c0, %c0_0] : memref<1x672xf32, #tpu.memory_space<vmem>>, vector<1x64xf32>
    %c0_1 = arith.constant 0 : index
    %c128 = arith.constant 128 : index
    %1 = vector.load %arg7[%c0_1, %c128] : memref<1x672xf32, #tpu.memory_space<vmem>>, vector<1x128xf32>
    %c0_2 = arith.constant 0 : index
    %c256 = arith.constant 256 : index
    %2 = vector.load %arg7[%c0_2, %c256] : memref<1x672xf32, #tpu.memory_space<vmem>>, vector<1x256xf32>
    %c0_3 = arith.constant 0 : index
    %c512 = arith.constant 512 : index
    %3 = vector.load %arg7[%c0_3, %c512] : memref<1x672xf32, #tpu.memory_space<vmem>>, vector<1x128xf32>
    %c0_4 = arith.constant 0 : index
    %c640 = arith.constant 640 : index
    %4 = vector.load %arg7[%c0_4, %c640] : memref<1x672xf32, #tpu.memory_space<vmem>>, vector<1x32xf32>
    %c0_i32 = arith.constant 0 : i32
    %c16_i32 = arith.constant 16 : i32
    %5 = arith.muli %c0_i32, %c16_i32 : i32
    %6 = tpu.assume_multiple %5, 16 : i32
    %7 = arith.index_cast %6 : i32 to index
    %c0_5 = arith.constant 0 : index
    %8 = vector.load %arg1[%7, %c0_5] : memref<16x32xf32, #tpu.memory_space<vmem>>, vector<16x32xf32>
    %9 = arith.truncf %8 : vector<16x32xf32> to vector<16x32xbf16>
    %c0_6 = arith.constant 0 : index
    %c0_7 = arith.constant 0 : index
    %10 = vector.load %arg2[%c0_6, %c0_7] : memref<32x64xbf16, #tpu.memory_space<vmem>>, vector<32x64xbf16>
    %cst = arith.constant dense<0.000000e+00> : vector<16x64xf32>
    %11 = tpu.matmul %9, %10, %cst {dimension_numbers = #tpu.dot_dimension_numbers<[1], [0], [0], [1], [0, 0, 1, 1], [], []>} : vector<16x32xbf16>, vector<32x64xbf16>, vector<16x64xf32> -> vector<16x64xf32>
    %12 = vector.broadcast %0 : vector<1x64xf32> to vector<16x64xf32>
    %13 = arith.addf %11, %12 : vector<16x64xf32>
    %cst_8 = arith.constant 0.000000e+00 : f32
    %14 = vector.broadcast %cst_8 : f32 to vector<16x64xf32>
    %15 = arith.maximumf %13, %14 : vector<16x64xf32>
    %16 = arith.truncf %15 : vector<16x64xf32> to vector<16x64xbf16>
    %c0_9 = arith.constant 0 : index
    %c0_10 = arith.constant 0 : index
    %17 = vector.load %arg3[%c0_9, %c0_10] : memref<64x128xbf16, #tpu.memory_space<vmem>>, vector<64x128xbf16>
    %cst_11 = arith.constant dense<0.000000e+00> : vector<16x128xf32>
    %18 = tpu.matmul %16, %17, %cst_11 {dimension_numbers = #tpu.dot_dimension_numbers<[1], [0], [0], [1], [0, 0, 1, 1], [], []>} : vector<16x64xbf16>, vector<64x128xbf16>, vector<16x128xf32> -> vector<16x128xf32>
    %19 = vector.broadcast %1 : vector<1x128xf32> to vector<16x128xf32>
    %20 = arith.addf %18, %19 : vector<16x128xf32>
    %cst_12 = arith.constant 0.000000e+00 : f32
    %21 = vector.broadcast %cst_12 : f32 to vector<16x128xf32>
    %22 = arith.maximumf %20, %21 : vector<16x128xf32>
    %23 = arith.truncf %22 : vector<16x128xf32> to vector<16x128xbf16>
    %c0_13 = arith.constant 0 : index
    %c0_14 = arith.constant 0 : index
    %24 = vector.load %arg4[%c0_13, %c0_14] : memref<128x256xbf16, #tpu.memory_space<vmem>>, vector<128x256xbf16>
    %cst_15 = arith.constant dense<0.000000e+00> : vector<16x256xf32>
    %25 = tpu.matmul %23, %24, %cst_15 {dimension_numbers = #tpu.dot_dimension_numbers<[1], [0], [0], [1], [0, 0, 1, 1], [], []>} : vector<16x128xbf16>, vector<128x256xbf16>, vector<16x256xf32> -> vector<16x256xf32>
    %26 = vector.broadcast %2 : vector<1x256xf32> to vector<16x256xf32>
    %27 = arith.addf %25, %26 : vector<16x256xf32>
    %cst_16 = arith.constant 0.000000e+00 : f32
    %28 = vector.broadcast %cst_16 : f32 to vector<16x256xf32>
    %29 = arith.maximumf %27, %28 : vector<16x256xf32>
    %30 = arith.truncf %29 : vector<16x256xf32> to vector<16x256xbf16>
    %c0_17 = arith.constant 0 : index
    %c0_18 = arith.constant 0 : index
    %31 = vector.load %arg5[%c0_17, %c0_18] : memref<256x128xbf16, #tpu.memory_space<vmem>>, vector<256x128xbf16>
    %cst_19 = arith.constant dense<0.000000e+00> : vector<16x128xf32>
    %32 = tpu.matmul %30, %31, %cst_19 {dimension_numbers = #tpu.dot_dimension_numbers<[1], [0], [0], [1], [0, 0, 1, 1], [], []>} : vector<16x256xbf16>, vector<256x128xbf16>, vector<16x128xf32> -> vector<16x128xf32>
    %33 = vector.broadcast %3 : vector<1x128xf32> to vector<16x128xf32>
    %34 = arith.addf %32, %33 : vector<16x128xf32>
    %cst_20 = arith.constant 0.000000e+00 : f32
    %35 = vector.broadcast %cst_20 : f32 to vector<16x128xf32>
    %36 = arith.maximumf %34, %35 : vector<16x128xf32>
    %37 = arith.truncf %36 : vector<16x128xf32> to vector<16x128xbf16>
    %c0_21 = arith.constant 0 : index
    %c0_22 = arith.constant 0 : index
    %38 = vector.load %arg6[%c0_21, %c0_22] : memref<128x32xbf16, #tpu.memory_space<vmem>>, vector<128x32xbf16>
    %cst_23 = arith.constant dense<0.000000e+00> : vector<16x32xf32>
    %39 = tpu.matmul %37, %38, %cst_23 {dimension_numbers = #tpu.dot_dimension_numbers<[1], [0], [0], [1], [0, 0, 1, 1], [], []>} : vector<16x128xbf16>, vector<128x32xbf16>, vector<16x32xf32> -> vector<16x32xf32>
    %40 = vector.broadcast %4 : vector<1x32xf32> to vector<16x32xf32>
    %41 = arith.addf %39, %40 : vector<16x32xf32>
    %42 = arith.index_cast %6 : i32 to index
    %c0_24 = arith.constant 0 : index
    %43 = vector.load %arg8[%42, %c0_24] : memref<16x32xf32, #tpu.memory_space<vmem>>, vector<16x32xf32>
    tpu.vector_store %arg8[%42, %c0_24], %41 {strides = array<i32>} : memref<16x32xf32, #tpu.memory_space<vmem>>, vector<16x32xf32>,
    %c1_i32 = arith.constant 1 : i32
    return
  }
  func.func @transform_0(%arg0: i32) -> (i32, i32) {
    %c0_i32 = arith.constant 0 : i32
    %c0_i32_0 = arith.constant 0 : i32
    return %arg0, %c0_i32 : i32, i32
  }
  func.func @transform_1(%arg0: i32) -> (i32, i32) {
    %c0_i32 = arith.constant 0 : i32
    %c0_i32_0 = arith.constant 0 : i32
    %c0_i32_1 = arith.constant 0 : i32
    return %c0_i32, %c0_i32_0 : i32, i32
  }
  func.func @transform_2(%arg0: i32) -> (i32, i32) {
    %c0_i32 = arith.constant 0 : i32
    %c0_i32_0 = arith.constant 0 : i32
    %c0_i32_1 = arith.constant 0 : i32
    return %c0_i32, %c0_i32_0 : i32, i32
  }
  func.func @transform_3(%arg0: i32) -> (i32, i32) {
    %c0_i32 = arith.constant 0 : i32
    %c0_i32_0 = arith.constant 0 : i32
    %c0_i32_1 = arith.constant 0 : i32
    return %c0_i32, %c0_i32_0 : i32, i32
  }
  func.func @transform_4(%arg0: i32) -> (i32, i32) {
    %c0_i32 = arith.constant 0 : i32
    %c0_i32_0 = arith.constant 0 : i32
    %c0_i32_1 = arith.constant 0 : i32
    return %c0_i32, %c0_i32_0 : i32, i32
  }
  func.func @transform_5(%arg0: i32) -> (i32, i32) {
    %c0_i32 = arith.constant 0 : i32
    %c0_i32_0 = arith.constant 0 : i32
    %c0_i32_1 = arith.constant 0 : i32
    return %c0_i32, %c0_i32_0 : i32, i32
  }
  func.func @transform_6(%arg0: i32) -> (i32, i32) {
    %c0_i32 = arith.constant 0 : i32
    %c0_i32_0 = arith.constant 0 : i32
    %c0_i32_1 = arith.constant 0 : i32
    return %c0_i32, %c0_i32_0 : i32, i32
  }
  func.func @transform_7(%arg0: i32) -> (i32, i32) {
    %c0_i32 = arith.constant 0 : i32
    %c0_i32_0 = arith.constant 0 : i32
    return %arg0, %c0_i32 : i32, i32
  }
}

</mosaic_0001>

<llo_original>
// kernel: tpu_custom_call.1
$region0: #{tpu_custom_call.1}
  #allocation0 [shape = 'u32[]', space=smem, size = 0x4, offset = 0x4, fixed_abs, tag = 'smem constant byte address 0x4 - core index']
  #allocation1 [shape = 'u32[144,128]{1,0:T(1,128)}', space=vmem, size = 0x12000, scoped, tag = 'internal scratch']
  %s0 = inlined_call_operand.vmem [shape: f32[20,32], index: 0, kind: input, shape index: {}]
  %s1 = inlined_call_operand.vmem [shape: bf16[32,64], index: 1, kind: input, shape index: {}]
  %s2 = inlined_call_operand.vmem [shape: bf16[64,128], index: 2, kind: input, shape index: {}]
  %s3 = inlined_call_operand.hbm [shape: bf16[128,256], index: 3, kind: input, shape index: {}]
  %s4 = inlined_call_operand.hbm [shape: bf16[256,128], index: 4, kind: input, shape index: {}]
  %s5 = inlined_call_operand.vmem [shape: bf16[128,32], index: 5, kind: input, shape index: {}]
  %s6 = inlined_call_operand.vmem [shape: f32[1,672], index: 6, kind: input, shape index: {}]
  %s7 = inlined_call_operand.hbm [shape: f32[20,32], index: 7, kind: output, shape index: {}]
  %s8 = sld [smem:[#allocation0]]
  $region69: #{tpu_custom_call.1} parent=0
    _
  %s10 = ssub.s32 1, %s8
  %s11 = scalar_select 0, %s10, %s8
  $region1: #{tpu_custom_call.1} parent=0
    #allocation2 [shape = 'u8[65536]{0}', space=vmem, size = 0x10000, scoped, tag = 'input window, operand 3, single buffered']
    #allocation3 [shape = 's32[2]{0}', space=sflag, size = 0x8, scoped, tag = 'scoped memory for tpu_custom_call.1']
    #allocation4 [shape = 's32[2]{0}', space=sflag, size = 0x8, scoped, tag = 'scoped memory for tpu_custom_call.1']
    #allocation5 [shape = 'u8[65536]{0}', space=vmem, size = 0x10000, scoped, tag = 'input window, operand 4, single buffered']
    #allocation6 [shape = 's32[1]{0}', space=sflag, size = 0x4, scoped, tag = 'scoped memory for tpu_custom_call.1']
    #allocation7 [shape = 'u8[16384]{0}', space=vmem, size = 0x4000, scoped, tag = 'output window, operand 0']
    %12 = vsyncpa [#allocation3], 0
    %13 = vsyncpa [#allocation6], 0
    %14 = vsyncpa [#allocation4], 0
    %s15 = scalar_lea.sflag [#allocation4], 1
    %16 = vsyncpa %s15, 0
    loop: start=0, step=1, limit=4
    $region2: #{tpu_custom_call.1} parent=1 // loop_pre_header
      _
    $region3: #{tpu_custom_call.1} parent=1 // loop_header
      %s18 = sphi 0, %s22
      %p19 = scmp.ge.s32.totalorder %s18, 4
      %s28 = sphi 0, %s30
      %s31 = sphi 0, %s28
      %s32 = sphi 0, %s31
      %s48 = sphi 0, %s32
      %s52 = sphi 0, %s52
      %s54 = sphi 0, %s52
      %s55 = sphi 0, %s54
      %s69 = sphi 0, %s55
      %s73 = sphi 0, %s73
      %s75 = sphi 0, %s73
      %s76 = sphi 0, %s75
      %s90 = sphi 0, %s76
      %s94 = sphi 0, %s94
      %s96 = sphi 0, %s94
      %s97 = sphi 0, %s96
      %s111 = sphi 0, %s97
      %s115 = sphi 0, %s115
      %s117 = sphi 0, %s115
      %s118 = sphi 0, %s117
      %s132 = sphi 0, %s118
      %s136 = sphi 0, %s136
      %s138 = sphi 0, %s136
      %s139 = sphi 0, %s138
      %s153 = sphi 0, %s139
      %s157 = sphi 0, %s157
      %s159 = sphi 0, %s157
      %s160 = sphi 0, %s159
      %s174 = sphi 0, %s160
      %s180 = sphi 0, %s182
      %s183 = sphi 0, %s180
      %s184 = sphi 0, %s183
      %s200 = sphi 0, %s184
    $region4: #{tpu_custom_call.1} parent=1 // loop_header_branch
      %21 = sbr.rel (%p19) target = $region8
    $region5: #{tpu_custom_call.1} parent=1 // loop_body
      %s23 = ssub.s32 %s18, 1
      %s24 = ssub.s32 %s18, 2
      %s25 = sadd.s32 %s18, 1
      %s26 = ssub.s32 %s18, %s25
      %p27 = scmp.eq.s32.totalorder %s26, 0
      %s29 = sadd.s32 %s28, 1
      %s30 = scalar_select %p27, %s28, %s29
      %p33 = pneg %p27
      %p34 = scmp.eq.s32.totalorder %s18, 1
      %p35 = por %p33, %p34
      %p36 = scmp.ne.s32.totalorder %s28, %s31
      %p37 = scmp.eq.s32.totalorder %s18, 0
      %p38 = por %p36, %p37
      %p39 = scmp.ne.s32.totalorder %s28, %s31
      %p40 = scmp.eq.s32.totalorder %s23, 1
      %p41 = por %p39, %p40
      %p42 = scmp.ne.s32.totalorder %s31, %s32
      %p43 = scmp.eq.s32.totalorder %s23, 0
      %p44 = por %p42, %p43
      %p45 = scmp.ne.s32.totalorder %s31, %s32
      %p46 = scmp.eq.s32.totalorder %s24, 1
      %p47 = por %p45, %p46
      %p49 = scmp.ne.s32.totalorder %s32, %s48
      %p50 = scmp.eq.s32.totalorder %s24, 0
      %p51 = por %p49, %p50
      %s53 = sadd.s32 %s52, 1
      %p56 = scmp.eq.s32.totalorder %s18, 1
      %p57 = scmp.ne.s32.totalorder %s52, %s54
      %p58 = scmp.eq.s32.totalorder %s18, 0
      %p59 = por %p57, %p58
      %p60 = scmp.ne.s32.totalorder %s52, %s54
      %p61 = scmp.eq.s32.totalorder %s23, 1
      %p62 = por %p60, %p61
      %p63 = scmp.ne.s32.totalorder %s54, %s55
      %p64 = scmp.eq.s32.totalorder %s23, 0
      %p65 = por %p63, %p64
      %p66 = scmp.ne.s32.totalorder %s54, %s55
      %p67 = scmp.eq.s32.totalorder %s24, 1
      %p68 = por %p66, %p67
      %p70 = scmp.ne.s32.totalorder %s55, %s69
      %p71 = scmp.eq.s32.totalorder %s24, 0
      %p72 = por %p70, %p71
      %s74 = sadd.s32 %s73, 1
      %p77 = scmp.eq.s32.totalorder %s18, 1
      %p78 = scmp.ne.s32.totalorder %s73, %s75
      %p79 = scmp.eq.s32.totalorder %s18, 0
      %p80 = por %p78, %p79
      %p81 = scmp.ne.s32.totalorder %s73, %s75
      %p82 = scmp.eq.s32.totalorder %s23, 1
      %p83 = por %p81, %p82
      %p84 = scmp.ne.s32.totalorder %s75, %s76
      %p85 = scmp.eq.s32.totalorder %s23, 0
      %p86 = por %p84, %p85
      %p87 = scmp.ne.s32.totalorder %s75, %s76
      %p88 = scmp.eq.s32.totalorder %s24, 1
      %p89 = por %p87, %p88
      %p91 = scmp.ne.s32.totalorder %s76, %s90
      %p92 = scmp.eq.s32.totalorder %s24, 0
      %p93 = por %p91, %p92
      %s95 = sadd.s32 %s94, 1
      %p98 = scmp.eq.s32.totalorder %s18, 1
      %p99 = scmp.ne.s32.totalorder %s94, %s96
      %p100 = scmp.eq.s32.totalorder %s18, 0
      %p101 = por %p99, %p100
      %p102 = scmp.ne.s32.totalorder %s94, %s96
      %p103 = scmp.eq.s32.totalorder %s23, 1
      %p104 = por %p102, %p103
      %p105 = scmp.ne.s32.totalorder %s96, %s97
      %p106 = scmp.eq.s32.totalorder %s23, 0
      %p107 = por %p105, %p106
      %p108 = scmp.ne.s32.totalorder %s96, %s97
      %p109 = scmp.eq.s32.totalorder %s24, 1
      %p110 = por %p108, %p109
      %p112 = scmp.ne.s32.totalorder %s97, %s111
      %p113 = scmp.eq.s32.totalorder %s24, 0
      %p114 = por %p112, %p113
      %s116 = sadd.s32 %s115, 1
      %p119 = scmp.eq.s32.totalorder %s18, 1
      %p120 = scmp.ne.s32.totalorder %s115, %s117
      %p121 = scmp.eq.s32.totalorder %s18, 0
      %p122 = por %p120, %p121
      %p123 = scmp.ne.s32.totalorder %s115, %s117
      %p124 = scmp.eq.s32.totalorder %s23, 1
      %p125 = por %p123, %p124
      %p126 = scmp.ne.s32.totalorder %s117, %s118
      %p127 = scmp.eq.s32.totalorder %s23, 0
      %p128 = por %p126, %p127
      %p129 = scmp.ne.s32.totalorder %s117, %s118
      %p130 = scmp.eq.s32.totalorder %s24, 1
      %p131 = por %p129, %p130
      %p133 = scmp.ne.s32.totalorder %s118, %s132
      %p134 = scmp.eq.s32.totalorder %s24, 0
      %p135 = por %p133, %p134
      %s137 = sadd.s32 %s136, 1
      %p140 = scmp.eq.s32.totalorder %s18, 1
      %p141 = scmp.ne.s32.totalorder %s136, %s138
      %p142 = scmp.eq.s32.totalorder %s18, 0
      %p143 = por %p141, %p142
      %p144 = scmp.ne.s32.totalorder %s136, %s138
      %p145 = scmp.eq.s32.totalorder %s23, 1
      %p146 = por %p144, %p145
      %p147 = scmp.ne.s32.totalorder %s138, %s139
      %p148 = scmp.eq.s32.totalorder %s23, 0
      %p149 = por %p147, %p148
      %p150 = scmp.ne.s32.totalorder %s138, %s139
      %p151 = scmp.eq.s32.totalorder %s24, 1
      %p152 = por %p150, %p151
      %p154 = scmp.ne.s32.totalorder %s139, %s153
      %p155 = scmp.eq.s32.totalorder %s24, 0
      %p156 = por %p154, %p155
      %s158 = sadd.s32 %s157, 1
      %p161 = scmp.eq.s32.totalorder %s18, 1
      %p162 = scmp.ne.s32.totalorder %s157, %s159
      %p163 = scmp.eq.s32.totalorder %s18, 0
      %p164 = por %p162, %p163
      %p165 = scmp.ne.s32.totalorder %s157, %s159
      %p166 = scmp.eq.s32.totalorder %s23, 1
      %p167 = por %p165, %p166
      %p168 = scmp.ne.s32.totalorder %s159, %s160
      %p169 = scmp.eq.s32.totalorder %s23, 0
      %p170 = por %p168, %p169
      %p171 = scmp.ne.s32.totalorder %s159, %s160
      %p172 = scmp.eq.s32.totalorder %s24, 1
      %p173 = por %p171, %p172
      %p175 = scmp.ne.s32.totalorder %s160, %s174
      %p176 = scmp.eq.s32.totalorder %s24, 0
      %p177 = por %p175, %p176
      %s178 = ssub.s32 %s18, %s25
      %p179 = scmp.eq.s32.totalorder %s178, 0
      %s181 = sadd.s32 %s180, 1
      %s182 = scalar_select %p179, %s180, %s181
      %p185 = pneg %p179
      %p186 = scmp.eq.s32.totalorder %s18, 1
      %p187 = por %p185, %p186
      %p188 = scmp.ne.s32.totalorder %s180, %s183
      %p189 = scmp.eq.s32.totalorder %s18, 0
      %p190 = por %p188, %p189
      %p191 = scmp.ne.s32.totalorder %s180, %s183
      %p192 = scmp.eq.s32.totalorder %s23, 1
      %p193 = por %p191, %p192
      %p194 = scmp.ne.s32.totalorder %s183, %s184
      %p195 = scmp.eq.s32.totalorder %s23, 0
      %p196 = por %p194, %p195
      %p197 = scmp.ne.s32.totalorder %s183, %s184
      %p198 = scmp.eq.s32.totalorder %s24, 1
      %p199 = por %p197, %p198
      %p201 = scmp.ne.s32.totalorder %s184, %s200
      %p202 = scmp.eq.s32.totalorder %s24, 0
      %p203 = por %p201, %p202
      %p204 = scmp.le.s32.totalorder 1, %s18
      %p205 = scmp.lt.s32.totalorder %s18, 3
      %p206 = pnand %p204, %p205
      %p207 = pneg %p206
      // Predicated region
      $region9: #{tpu_custom_call.1} parent=5 // pred_check
        _
      $region10: #{tpu_custom_call.1} parent=5 // pred_check_branch
        %209 = sbr.rel (%p206) target = $region12
      $region11: #{tpu_custom_call.1} parent=5 // pred_region
        %s210 = ssub.s32 %s18, 1
        // Predicated region
        $region13: #{tpu_custom_call.1} parent=11 // pred_check
          %p211 = pneg %p65
        $region14: #{tpu_custom_call.1} parent=11 // pred_check_branch
          %213 = sbr.rel (%p211) target = $region16
        $region15: #{tpu_custom_call.1} parent=11 // pred_region
          _
        $region16: #{tpu_custom_call.1} parent=11 // pred_fallthru
          _
        // Predicated region
        $region17: #{tpu_custom_call.1} parent=11 // pred_check
          %p214 = pneg %p86
        $region18: #{tpu_custom_call.1} parent=11 // pred_check_branch
          %216 = sbr.rel (%p214) target = $region20
        $region19: #{tpu_custom_call.1} parent=11 // pred_region
          _
        $region20: #{tpu_custom_call.1} parent=11 // pred_fallthru
          _
        // Predicated region
        $region21: #{tpu_custom_call.1} parent=11 // pred_check
          %p217 = pneg %p107
        $region22: #{tpu_custom_call.1} parent=11 // pred_check_branch
          %219 = sbr.rel (%p217) target = $region24
        $region23: #{tpu_custom_call.1} parent=11 // pred_region
          %s221 = ssub.s32 2048, 2048
          %222 = vsyncadd [#allocation3], %s221
          %s223 = sshll.u32 [#allocation2], 4
          %s224 = int_to_ptr.vmem [resolvable:$true] %s223
          %229 = dma.hbm_to_vmem [thread:$0]  %s3, 2048, %s224, [#allocation3], 128, 128, 8
        $region24: #{tpu_custom_call.1} parent=11 // pred_fallthru
          _
        // Predicated region
        $region25: #{tpu_custom_call.1} parent=11 // pred_check
          %p230 = pneg %p128
        $region26: #{tpu_custom_call.1} parent=11 // pred_check_branch
          %232 = sbr.rel (%p230) target = $region28
        $region27: #{tpu_custom_call.1} parent=11 // pred_region
          %s234 = ssub.s32 2048, 2048
          %235 = vsyncadd [#allocation6], %s234
          %s236 = sshll.u32 [#allocation5], 4
          %s237 = int_to_ptr.vmem [resolvable:$true] %s236
          %242 = dma.hbm_to_vmem [thread:$0]  %s4, 2048, %s237, [#allocation6], 64, 64, 4
        $region28: #{tpu_custom_call.1} parent=11 // pred_fallthru
          _
        // Predicated region
        $region29: #{tpu_custom_call.1} parent=11 // pred_check
          %p243 = pneg %p149
        $region30: #{tpu_custom_call.1} parent=11 // pred_check_branch
          %245 = sbr.rel (%p243) target = $region32
        $region31: #{tpu_custom_call.1} parent=11 // pred_region
          _
        $region32: #{tpu_custom_call.1} parent=11 // pred_fallthru
          _
        // Predicated region
        $region33: #{tpu_custom_call.1} parent=11 // pred_check
          %p246 = pneg %p170
        $region34: #{tpu_custom_call.1} parent=11 // pred_check_branch
          %248 = sbr.rel (%p246) target = $region36
        $region35: #{tpu_custom_call.1} parent=11 // pred_region
          _
        $region36: #{tpu_custom_call.1} parent=11 // pred_fallthru
          _
      $region12: #{tpu_custom_call.1} parent=5 // pred_fallthru
        _
      %p249 = scmp.lt.s32.totalorder %s18, 2
      // Predicated region
      $region37: #{tpu_custom_call.1} parent=5 // pred_check
        %p250 = pneg %p249
      $region38: #{tpu_custom_call.1} parent=5 // pred_check_branch
        %252 = sbr.rel (%p250) target = $region40
      $region39: #{tpu_custom_call.1} parent=5 // pred_region
        // Predicated region
        $region41: #{tpu_custom_call.1} parent=39 // pred_check
          %p253 = pneg %p38
        $region42: #{tpu_custom_call.1} parent=39 // pred_check_branch
          %255 = sbr.rel (%p253) target = $region44
        $region43: #{tpu_custom_call.1} parent=39 // pred_region
          %s256 = smul.u32 2, %s18
          %s257 = ssub.s32 3, %s256
          %p258 = scmp.lt.s32.totalorder %s257, 2
          %s259 = scalar_select %p258, %s257, 2
          %s260 = smul.u32 128, %s259
          %p261 = scmp.lt.s32.totalorder %s256, 2
          %s262 = scalar_select %p261, %s256, 2
          %s263 = smul.addr %s262, 8
          %s264 = scalar_lea.vmem %s0, %s263
          %s265 = smul.u32 2, %s18
          %s266 = ssub.s32 3, %s265
          %p267 = scmp.lt.s32.totalorder %s266, 2
          %s268 = scalar_select %p267, %s266, 2
          %s269 = smul.u32 128, %s268
        $region44: #{tpu_custom_call.1} parent=39 // pred_fallthru
          _
      $region40: #{tpu_custom_call.1} parent=5 // pred_fallthru
        _
      %p270 = scmp.le.s32.totalorder 1, %s18
      %p271 = scmp.lt.s32.totalorder %s18, 3
      %p272 = pnand %p270, %p271
      %p273 = pneg %p272
      // Predicated region
      $region45: #{tpu_custom_call.1} parent=5 // pred_check
        _
      $region46: #{tpu_custom_call.1} parent=5 // pred_check_branch
        %275 = sbr.rel (%p272) target = $region48
      $region47: #{tpu_custom_call.1} parent=5 // pred_region
        %s276 = ssub.s32 %s18, 1
        // Predicated region
        $region49: #{tpu_custom_call.1} parent=47 // pred_check
          %p277 = pneg %p107
        $region50: #{tpu_custom_call.1} parent=47 // pred_check_branch
          %279 = sbr.rel (%p277) target = $region52
        $region51: #{tpu_custom_call.1} parent=47 // pred_region
          %280 = dma.done [#allocation3], 2048
        $region52: #{tpu_custom_call.1} parent=47 // pred_fallthru
          _
        // Predicated region
        $region53: #{tpu_custom_call.1} parent=47 // pred_check
          %p281 = pneg %p128
        $region54: #{tpu_custom_call.1} parent=47 // pred_check_branch
          %283 = sbr.rel (%p281) target = $region56
        $region55: #{tpu_custom_call.1} parent=47 // pred_region
          %284 = dma.done [#allocation6], 2048
        $region56: #{tpu_custom_call.1} parent=47 // pred_fallthru
          _
        %s285 = smul.u32 2, %s23
        %s286 = ssub.s32 3, %s285
        %p287 = scmp.lt.s32.totalorder %s286, 2
        %s288 = scalar_select %p287, %s286, 2
        %s289 = smul.u32 128, %s288
        %p290 = scmp.lt.s32.totalorder %s285, 2
        %s291 = scalar_select %p290, %s285, 2
        %s292 = smul.addr %s291, 8
        %s293 = scalar_lea.vmem %s0, %s292
        %p294 = pneg %p44
        %p295 = pneg %p41
        %p296 = pneg %p65
        %p297 = pneg %p62
        %p298 = pneg %p86
        %p299 = pneg %p83
        %p300 = pneg %p107
        %p301 = pneg %p104
        %p302 = pneg %p128
        %p303 = pneg %p125
        %p304 = pneg %p149
        %p305 = pneg %p146
        %p306 = pneg %p170
        %p307 = pneg %p167
        %p308 = pneg %p196
        %p309 = pneg %p193
        %s310 = sand.u32 %s183, 1
        %s311 = scalar_lea.sflag [#allocation4], %s310
        %s312 = sand.u32 %s183, 1
        %s313 = smul.addr %s312, 16
        %s314 = scalar_lea.vmem [#allocation7], %s313
        %s315 = smul.u32 2, %s23
        %s316 = ssub.s32 3, %s315
        %p317 = scmp.lt.s32.totalorder %s316, 2
        %s318 = scalar_select %p317, %s316, 2
        %s319 = smul.u32 128, %s318
        %p320 = scmp.lt.s32.totalorder %s315, 2
        %s321 = scalar_select %p320, %s315, 2
        %s322 = smul.addr %s321, 8
        %s323 = scalar_lea.vmem %s0, %s322
        %s324 = smul.u32 2, %s23
        %s325 = ssub.s32 3, %s324
        %p326 = scmp.lt.s32.totalorder %s325, 2
        %s327 = scalar_select %p326, %s325, 2
        %s328 = smul.u32 128, %s327
        %s329 = smul.u32 2, %s23
        %s330 = ssub.s32 3, %s329
        %p331 = scmp.lt.s32.totalorder %s330, 2
        %s332 = scalar_select %p331, %s330, 2
        %s333 = smul.u32 128, %s332
        %v335 = vld [vmem:[%s6] sm:$0x1]
        %v336 = vld [vmem:[%s6 + $0x1] sm:$0x1]
        %v337 = vld [vmem:[%s6 + $0x2] sm:$0x3]
        %v338 = vld [vmem:[%s6 + $0x4] sm:$0x1]
        %v339 = vld [vmem:[%s6 + $0x5] sm:$0x1]
        %v340 = vld [vmem:[%s323] sm:$0xff]
        %v341 = vld [vmem:[%s323 + $0x8] sm:$0xff]
        %v342 = vpack.c.bf16 %v341, %v340
        %v343 = vld [vmem:[%s1] sm:$0xf]
        %v344 = vld [vmem:[%s1 + $0x4] sm:$0xf]
        %v345 = vld [vmem:[%s1 + $0x8] sm:$0xf]
        %v346 = vld [vmem:[%s1 + $0xc] sm:$0xf]
        %v348 = vlaneseq
        %v349 = vshrl.u32 %v348, 7
        %v350 = vsub.s32 0, %v349
        %v351 = vrot.slane %v335, %v350
        %v357 = vunpack.c.l.b16 %v343
        %v358 = vunpack.c.l.b16 %v344
        %v359 = vunpack.c.l.b16 %v345
        %v360 = vunpack.c.l.b16 %v346
        %v361 = vpack.c.b16 %v358, %v357
        %v362 = vpack.c.b16 %v360, %v359
        %vm365 = vcmask 261120
        %v367 = vsel %vm365, %v342, 0
        %369 = vmatprep.subr.bf16.mxu0 0
        %370 = vmatpush1.bf16.msra.mxu0 %v361
        %371 = vmatprep.subr.bf16.mxu0 0
        %372 = vmatpush1.bf16.msra.mxu0 %v362
        %373 = vmatprep.subr.bf16.mxu0 0
        %374 = vmatpush1.bf16.msra.mxu0 0
        %375 = vmatprep.subr.bf16.mxu0 0
        %376 = vmatpush1.bf16.msra.mxu0 0
        %377 = vmatprep.subr.bf16.mxu0 0
        %378 = vmatpush1.bf16.msra.mxu0 0
        %379 = vmatprep.subr.bf16.mxu0 0
        %380 = vmatpush1.bf16.msra.mxu0 0
        %381 = vmatprep.subr.bf16.mxu0 0
        %382 = vmatpush1.bf16.msra.mxu0 0
        %383 = vmatprep.subr.bf16.mxu0 0
        %384 = vmatpush1.bf16.msra.mxu0 0
        %385 = vmatprep.subr.bf16.mxu0 0
        %386 = vmatpush1.bf16.msra.mxu0 0
        %387 = vmatprep.subr.bf16.mxu0 0
        %388 = vmatpush1.bf16.msra.mxu0 0
        %389 = vmatprep.subr.bf16.mxu0 0
        %390 = vmatpush1.bf16.msra.mxu0 0
        %391 = vmatprep.subr.bf16.mxu0 0
        %392 = vmatpush1.bf16.msra.mxu0 0
        %393 = vmatprep.subr.bf16.mxu0 0
        %394 = vmatpush1.bf16.msra.mxu0 0
        %395 = vmatprep.subr.bf16.mxu0 0
        %396 = vmatpush1.bf16.msra.mxu0 0
        %397 = vmatprep.subr.bf16.mxu0 0
        %398 = vmatpush1.bf16.msra.mxu0 0
        %399 = vmatprep.subr.bf16.mxu0 0
        %400 = vmatpush1.bf16.msra.mxu0 0
        %401 = vmatprep.mubr.bf16.mxu0 0
        %402 = vmatmul.mubr.bf16.gmra.mrb[0].mxu0 %v367
        %v403 = vpop.f32.mrb[0].mxu0
        %v404 = vadd.f32 %v351, %v403
        %v405 = vpop.f32.mrb[0].mxu0
        %v406 = vpop.f32.mrb[0].mxu0
        %v407 = vadd.f32 %v351, %v406
        %v408 = vpop.f32.mrb[0].mxu0
        %409 = vdwg.mxu0
        %v410 = vmax.f32 %v404, 0.0
        %v411 = vmax.f32 %v407, 0.0
        %v412 = vpack.c.bf16 %v411, %v410
        %v413 = vld [vmem:[%s2] sm:$0xf]
        %v414 = vld [vmem:[%s2 + $0x4] sm:$0xf]
        %v415 = vld [vmem:[%s2 + $0x8] sm:$0xf]
        %v416 = vld [vmem:[%s2 + $0xc] sm:$0xf]
        %v417 = vld [vmem:[%s2 + $0x10] sm:$0xf]
        %v418 = vld [vmem:[%s2 + $0x14] sm:$0xf]
        %v419 = vld [vmem:[%s2 + $0x18] sm:$0xf]
        %v420 = vld [vmem:[%s2 + $0x1c] sm:$0xf]
        %v422 = vlaneseq
        %v423 = vshrl.u32 %v422, 7
        %v424 = vsub.s32 0, %v423
        %v425 = vrot.slane %v336, %v424
        %v435 = vunpack.c.l.b16 %v413
        %v436 = vunpack.c.l.b16 %v414
        %v437 = vunpack.c.l.b16 %v415
        %v438 = vunpack.c.l.b16 %v416
        %v439 = vunpack.c.l.b16 %v417
        %v440 = vunpack.c.l.b16 %v418
        %v441 = vunpack.c.l.b16 %v419
        %v442 = vunpack.c.l.b16 %v420
        %v443 = vpack.c.b16 %v436, %v435
        %v444 = vpack.c.b16 %v438, %v437
        %v445 = vpack.c.b16 %v440, %v439
        %v446 = vpack.c.b16 %v442, %v441
        %vm451 = vcmask 523264
        %v453 = vsel %vm451, %v412, 0
        %455 = vmatprep.subr.bf16.mxu0 0
        %456 = vmatpush1.bf16.msra.mxu0 %v443
        %457 = vmatprep.subr.bf16.mxu0 0
        %458 = vmatpush1.bf16.msra.mxu0 %v444
        %459 = vmatprep.subr.bf16.mxu0 0
        %460 = vmatpush1.bf16.msra.mxu0 %v445
        %461 = vmatprep.subr.bf16.mxu0 0
        %462 = vmatpush1.bf16.msra.mxu0 %v446
        %463 = vmatprep.subr.bf16.mxu0 0
        %464 = vmatpush1.bf16.msra.mxu0 0
        %465 = vmatprep.subr.bf16.mxu0 0
        %466 = vmatpush1.bf16.msra.mxu0 0
        %467 = vmatprep.subr.bf16.mxu0 0
        %468 = vmatpush1.bf16.msra.mxu0 0
        %469 = vmatprep.subr.bf16.mxu0 0
        %470 = vmatpush1.bf16.msra.mxu0 0
        %471 = vmatprep.subr.bf16.mxu0 0
        %472 = vmatpush1.bf16.msra.mxu0 0
        %473 = vmatprep.subr.bf16.mxu0 0
        %474 = vmatpush1.bf16.msra.mxu0 0
        %475 = vmatprep.subr.bf16.mxu0 0
        %476 = vmatpush1.bf16.msra.mxu0 0
        %477 = vmatprep.subr.bf16.mxu0 0
        %478 = vmatpush1.bf16.msra.mxu0 0
        %479 = vmatprep.subr.bf16.mxu0 0
        %480 = vmatpush1.bf16.msra.mxu0 0
        %481 = vmatprep.subr.bf16.mxu0 0
        %482 = vmatpush1.bf16.msra.mxu0 0
        %483 = vmatprep.subr.bf16.mxu0 0
        %484 = vmatpush1.bf16.msra.mxu0 0
        %485 = vmatprep.subr.bf16.mxu0 0
        %486 = vmatpush1.bf16.msra.mxu0 0
        %487 = vmatprep.mubr.bf16.mxu0 0
        %488 = vmatmul.mubr.bf16.gmra.mrb[0].mxu0 %v453
        %v489 = vpop.f32.mrb[0].mxu0
        %v490 = vadd.f32 %v425, %v489
        %v491 = vpop.f32.mrb[0].mxu0
        %v492 = vpop.f32.mrb[0].mxu0
        %v493 = vadd.f32 %v425, %v492
        %v494 = vpop.f32.mrb[0].mxu0
        %495 = vdwg.mxu0
        %v496 = vmax.f32 %v490, 0.0
        %v497 = vmax.f32 %v493, 0.0
        %v498 = vpack.c.bf16 %v497, %v496
        %v499 = vld [vmem:[#allocation2] sm:$0xff]
        %v500 = vld [vmem:[#allocation2 + $0x8] sm:$0xff]
        %v501 = vld [vmem:[#allocation2 + $0x10] sm:$0xff]
        %v502 = vld [vmem:[#allocation2 + $0x18] sm:$0xff]
        %v503 = vld [vmem:[#allocation2 + $0x20] sm:$0xff]
        %v504 = vld [vmem:[#allocation2 + $0x28] sm:$0xff]
        %v505 = vld [vmem:[#allocation2 + $0x30] sm:$0xff]
        %v506 = vld [vmem:[#allocation2 + $0x38] sm:$0xff]
        %v507 = vld [vmem:[#allocation2 + $0x40] sm:$0xff]
        %v508 = vld [vmem:[#allocation2 + $0x48] sm:$0xff]
        %v509 = vld [vmem:[#allocation2 + $0x50] sm:$0xff]
        %v510 = vld [vmem:[#allocation2 + $0x58] sm:$0xff]
        %v511 = vld [vmem:[#allocation2 + $0x60] sm:$0xff]
        %v512 = vld [vmem:[#allocation2 + $0x68] sm:$0xff]
        %v513 = vld [vmem:[#allocation2 + $0x70] sm:$0xff]
        %v514 = vld [vmem:[#allocation2 + $0x78] sm:$0xff]
        %v516 = vlaneseq
        %v517 = vshrl.u32 %v516, 7
        %v518 = vsub.s32 0, %v517
        %v519 = vrot.slane %v337, %v518
        %v520 = vlaneseq
        %v521 = vshrl.u32 %v520, 7
        %v522 = vsub.s32 1, %v521
        %v523 = vrot.slane %v337, %v522
        %v542 = vunpack.c.l.b16 %v499
        %v543 = vunpack.c.h.b16 %v499
        %v544 = vunpack.c.l.b16 %v500
        %v545 = vunpack.c.h.b16 %v500
        %v546 = vunpack.c.l.b16 %v501
        %v547 = vunpack.c.h.b16 %v501
        %v548 = vunpack.c.l.b16 %v502
        %v549 = vunpack.c.h.b16 %v502
        %v550 = vunpack.c.l.b16 %v503
        %v551 = vunpack.c.h.b16 %v503
        %v552 = vunpack.c.l.b16 %v504
        %v553 = vunpack.c.h.b16 %v504
        %v554 = vunpack.c.l.b16 %v505
        %v555 = vunpack.c.h.b16 %v505
        %v556 = vunpack.c.l.b16 %v506
        %v557 = vunpack.c.h.b16 %v506
        %v558 = vunpack.c.l.b16 %v507
        %v559 = vunpack.c.h.b16 %v507
        %v560 = vunpack.c.l.b16 %v508
        %v561 = vunpack.c.h.b16 %v508
        %v562 = vunpack.c.l.b16 %v509
        %v563 = vunpack.c.h.b16 %v509
        %v564 = vunpack.c.l.b16 %v510
        %v565 = vunpack.c.h.b16 %v510
        %v566 = vunpack.c.l.b16 %v511
        %v567 = vunpack.c.h.b16 %v511
        %v568 = vunpack.c.l.b16 %v512
        %v569 = vunpack.c.h.b16 %v512
        %v570 = vunpack.c.l.b16 %v513
        %v571 = vunpack.c.h.b16 %v513
        %v572 = vunpack.c.l.b16 %v514
        %v573 = vunpack.c.h.b16 %v514
        %v574 = vpack.c.b16 %v544, %v542
        %v575 = vpack.c.b16 %v545, %v543
        %v576 = vpack.c.b16 %v548, %v546
        %v577 = vpack.c.b16 %v549, %v547
        %v578 = vpack.c.b16 %v552, %v550
        %v579 = vpack.c.b16 %v553, %v551
        %v580 = vpack.c.b16 %v556, %v554
        %v581 = vpack.c.b16 %v557, %v555
        %v582 = vpack.c.b16 %v560, %v558
        %v583 = vpack.c.b16 %v561, %v559
        %v584 = vpack.c.b16 %v564, %v562
        %v585 = vpack.c.b16 %v565, %v563
        %v586 = vpack.c.b16 %v568, %v566
        %v587 = vpack.c.b16 %v569, %v567
        %v588 = vpack.c.b16 %v572, %v570
        %v589 = vpack.c.b16 %v573, %v571
        %606 = vmatprep.subr.bf16.mxu0 %v575
        %607 = vmatpush1.bf16.msra.mxu0 %v574
        %608 = vmatprep.subr.bf16.mxu0 %v577
        %609 = vmatpush1.bf16.msra.mxu0 %v576
        %610 = vmatprep.subr.bf16.mxu0 %v579
        %611 = vmatpush1.bf16.msra.mxu0 %v578
        %612 = vmatprep.subr.bf16.mxu0 %v581
        %613 = vmatpush1.bf16.msra.mxu0 %v580
        %614 = vmatprep.subr.bf16.mxu0 %v583
        %615 = vmatpush1.bf16.msra.mxu0 %v582
        %616 = vmatprep.subr.bf16.mxu0 %v585
        %617 = vmatpush1.bf16.msra.mxu0 %v584
        %618 = vmatprep.subr.bf16.mxu0 %v587
        %619 = vmatpush1.bf16.msra.mxu0 %v586
        %620 = vmatprep.subr.bf16.mxu0 %v589
        %621 = vmatpush1.bf16.msra.mxu0 %v588
        %622 = vmatprep.subr.bf16.mxu0 0
        %623 = vmatpush1.bf16.msra.mxu0 0
        %624 = vmatprep.subr.bf16.mxu0 0
        %625 = vmatpush1.bf16.msra.mxu0 0
        %626 = vmatprep.subr.bf16.mxu0 0
        %627 = vmatpush1.bf16.msra.mxu0 0
        %628 = vmatprep.subr.bf16.mxu0 0
        %629 = vmatpush1.bf16.msra.mxu0 0
        %630 = vmatprep.subr.bf16.mxu0 0
        %631 = vmatpush1.bf16.msra.mxu0 0
        %632 = vmatprep.subr.bf16.mxu0 0
        %633 = vmatpush1.bf16.msra.mxu0 0
        %634 = vmatprep.subr.bf16.mxu0 0
        %635 = vmatpush1.bf16.msra.mxu0 0
        %636 = vmatprep.subr.bf16.mxu0 0
        %637 = vmatpush1.bf16.msra.mxu0 0
        %638 = vmatprep.mubr.bf16.mxu0 0
        %639 = vmatmul.mubr.bf16.gmra.mrb[0].mxu0 %v498
        %v640 = vpop.f32.mrb[0].mxu0
        %v641 = vadd.f32 %v519, %v640
        %v642 = vpop.f32.mrb[0].mxu0
        %v643 = vadd.f32 %v523, %v642
        %v644 = vpop.f32.mrb[0].mxu0
        %v645 = vadd.f32 %v519, %v644
        %v646 = vpop.f32.mrb[0].mxu0
        %v647 = vadd.f32 %v523, %v646
        %648 = vdwg.mxu0
        %v649 = vmax.f32 %v641, 0.0
        %v650 = vmax.f32 %v643, 0.0
        %v651 = vmax.f32 %v645, 0.0
        %v652 = vmax.f32 %v647, 0.0
        %v653 = vpack.c.bf16 %v651, %v649
        %v654 = vpack.c.bf16 %v652, %v650
        %v655 = vld [vmem:[#allocation5] sm:$0xf]
        %v656 = vld [vmem:[#allocation5 + $0x4] sm:$0xf]
        %v657 = vld [vmem:[#allocation5 + $0x8] sm:$0xf]
        %v658 = vld [vmem:[#allocation5 + $0xc] sm:$0xf]
        %v659 = vld [vmem:[#allocation5 + $0x10] sm:$0xf]
        %v660 = vld [vmem:[#allocation5 + $0x14] sm:$0xf]
        %v661 = vld [vmem:[#allocation5 + $0x18] sm:$0xf]
        %v662 = vld [vmem:[#allocation5 + $0x1c] sm:$0xf]
        %v663 = vld [vmem:[#allocation5 + $0x20] sm:$0xf]
        %v664 = vld [vmem:[#allocation5 + $0x24] sm:$0xf]
        %v665 = vld [vmem:[#allocation5 + $0x28] sm:$0xf]
        %v666 = vld [vmem:[#allocation5 + $0x2c] sm:$0xf]
        %v667 = vld [vmem:[#allocation5 + $0x30] sm:$0xf]
        %v668 = vld [vmem:[#allocation5 + $0x34] sm:$0xf]
        %v669 = vld [vmem:[#allocation5 + $0x38] sm:$0xf]
        %v670 = vld [vmem:[#allocation5 + $0x3c] sm:$0xf]
        %v671 = vld [vmem:[#allocation5 + $0x40] sm:$0xf]
        %v672 = vld [vmem:[#allocation5 + $0x44] sm:$0xf]
        %v673 = vld [vmem:[#allocation5 + $0x48] sm:$0xf]
        %v674 = vld [vmem:[#allocation5 + $0x4c] sm:$0xf]
        %v675 = vld [vmem:[#allocation5 + $0x50] sm:$0xf]
        %v676 = vld [vmem:[#allocation5 + $0x54] sm:$0xf]
        %v677 = vld [vmem:[#allocation5 + $0x58] sm:$0xf]
        %v678 = vld [vmem:[#allocation5 + $0x5c] sm:$0xf]
        %v679 = vld [vmem:[#allocation5 + $0x60] sm:$0xf]
        %v680 = vld [vmem:[#allocation5 + $0x64] sm:$0xf]
        %v681 = vld [vmem:[#allocation5 + $0x68] sm:$0xf]
        %v682 = vld [vmem:[#allocation5 + $0x6c] sm:$0xf]
        %v683 = vld [vmem:[#allocation5 + $0x70] sm:$0xf]
        %v684 = vld [vmem:[#allocation5 + $0x74] sm:$0xf]
        %v685 = vld [vmem:[#allocation5 + $0x78] sm:$0xf]
        %v686 = vld [vmem:[#allocation5 + $0x7c] sm:$0xf]
        %v688 = vlaneseq
        %v689 = vshrl.u32 %v688, 7
        %v690 = vsub.s32 0, %v689
        %v691 = vrot.slane %v338, %v690
        %v725 = vunpack.c.l.b16 %v655
        %v726 = vunpack.c.l.b16 %v656
        %v727 = vunpack.c.l.b16 %v657
        %v728 = vunpack.c.l.b16 %v658
        %v729 = vunpack.c.l.b16 %v659
        %v730 = vunpack.c.l.b16 %v660
        %v731 = vunpack.c.l.b16 %v661
        %v732 = vunpack.c.l.b16 %v662
        %v733 = vunpack.c.l.b16 %v663
        %v734 = vunpack.c.l.b16 %v664
        %v735 = vunpack.c.l.b16 %v665
        %v736 = vunpack.c.l.b16 %v666
        %v737 = vunpack.c.l.b16 %v667
        %v738 = vunpack.c.l.b16 %v668
        %v739 = vunpack.c.l.b16 %v669
        %v740 = vunpack.c.l.b16 %v670
        %v741 = vunpack.c.l.b16 %v671
        %v742 = vunpack.c.l.b16 %v672
        %v743 = vunpack.c.l.b16 %v673
        %v744 = vunpack.c.l.b16 %v674
        %v745 = vunpack.c.l.b16 %v675
        %v746 = vunpack.c.l.b16 %v676
        %v747 = vunpack.c.l.b16 %v677
        %v748 = vunpack.c.l.b16 %v678
        %v749 = vunpack.c.l.b16 %v679
        %v750 = vunpack.c.l.b16 %v680
        %v751 = vunpack.c.l.b16 %v681
        %v752 = vunpack.c.l.b16 %v682
        %v753 = vunpack.c.l.b16 %v683
        %v754 = vunpack.c.l.b16 %v684
        %v755 = vunpack.c.l.b16 %v685
        %v756 = vunpack.c.l.b16 %v686
        %v757 = vpack.c.b16 %v726, %v725
        %v758 = vpack.c.b16 %v728, %v727
        %v759 = vpack.c.b16 %v730, %v729
        %v760 = vpack.c.b16 %v732, %v731
        %v761 = vpack.c.b16 %v734, %v733
        %v762 = vpack.c.b16 %v736, %v735
        %v763 = vpack.c.b16 %v738, %v737
        %v764 = vpack.c.b16 %v740, %v739
        %v765 = vpack.c.b16 %v742, %v741
        %v766 = vpack.c.b16 %v744, %v743
        %v767 = vpack.c.b16 %v746, %v745
        %v768 = vpack.c.b16 %v748, %v747
        %v769 = vpack.c.b16 %v750, %v749
        %v770 = vpack.c.b16 %v752, %v751
        %v771 = vpack.c.b16 %v754, %v753
        %v772 = vpack.c.b16 %v756, %v755
        %789 = vmatprep.subr.bf16.mxu0 0
        %790 = vmatpush1.bf16.msra.mxu0 %v757
        %791 = vmatprep.subr.bf16.mxu0 0
        %792 = vmatpush1.bf16.msra.mxu0 %v758
        %793 = vmatprep.subr.bf16.mxu0 0
        %794 = vmatpush1.bf16.msra.mxu0 %v759
        %795 = vmatprep.subr.bf16.mxu0 0
        %796 = vmatpush1.bf16.msra.mxu0 %v760
        %797 = vmatprep.subr.bf16.mxu0 0
        %798 = vmatpush1.bf16.msra.mxu0 %v761
        %799 = vmatprep.subr.bf16.mxu0 0
        %800 = vmatpush1.bf16.msra.mxu0 %v762
        %801 = vmatprep.subr.bf16.mxu0 0
        %802 = vmatpush1.bf16.msra.mxu0 %v763
        %803 = vmatprep.subr.bf16.mxu0 0
        %804 = vmatpush1.bf16.msra.mxu0 %v764
        %805 = vmatprep.subr.bf16.mxu0 0
        %806 = vmatpush1.bf16.msra.mxu0 %v765
        %807 = vmatprep.subr.bf16.mxu0 0
        %808 = vmatpush1.bf16.msra.mxu0 %v766
        %809 = vmatprep.subr.bf16.mxu0 0
        %810 = vmatpush1.bf16.msra.mxu0 %v767
        %811 = vmatprep.subr.bf16.mxu0 0
        %812 = vmatpush1.bf16.msra.mxu0 %v768
        %813 = vmatprep.subr.bf16.mxu0 0
        %814 = vmatpush1.bf16.msra.mxu0 %v769
        %815 = vmatprep.subr.bf16.mxu0 0
        %816 = vmatpush1.bf16.msra.mxu0 %v770
        %817 = vmatprep.subr.bf16.mxu0 0
        %818 = vmatpush1.bf16.msra.mxu0 %v771
        %819 = vmatprep.subr.bf16.mxu0 0
        %820 = vmatpush1.bf16.msra.mxu0 %v772
        %821 = vmatprep.mubr.bf16.mxu0 %v654
        %822 = vmatmul.mubr.bf16.gmra.mrb[0].mxu0 %v653
        %v823 = vpop.f32.mrb[0].mxu0
        %v824 = vadd.f32 %v691, %v823
        %v825 = vpop.f32.mrb[0].mxu0
        %v826 = vpop.f32.mrb[0].mxu0
        %v827 = vadd.f32 %v691, %v826
        %v828 = vpop.f32.mrb[0].mxu0
        %829 = vdwg.mxu0
        %v830 = vmax.f32 %v824, 0.0
        %v831 = vmax.f32 %v827, 0.0
        %v832 = vpack.c.bf16 %v831, %v830
        %v833 = vld [vmem:[%s5] sm:$0xf]
        %v834 = vld [vmem:[%s5 + $0x4] sm:$0xf]
        %v835 = vld [vmem:[%s5 + $0x8] sm:$0xf]
        %v836 = vld [vmem:[%s5 + $0xc] sm:$0xf]
        %v837 = vld [vmem:[%s5 + $0x10] sm:$0xf]
        %v838 = vld [vmem:[%s5 + $0x14] sm:$0xf]
        %v839 = vld [vmem:[%s5 + $0x18] sm:$0xf]
        %v840 = vld [vmem:[%s5 + $0x1c] sm:$0xf]
        %v841 = vld [vmem:[%s5 + $0x20] sm:$0xf]
        %v842 = vld [vmem:[%s5 + $0x24] sm:$0xf]
        %v843 = vld [vmem:[%s5 + $0x28] sm:$0xf]
        %v844 = vld [vmem:[%s5 + $0x2c] sm:$0xf]
        %v845 = vld [vmem:[%s5 + $0x30] sm:$0xf]
        %v846 = vld [vmem:[%s5 + $0x34] sm:$0xf]
        %v847 = vld [vmem:[%s5 + $0x38] sm:$0xf]
        %v848 = vld [vmem:[%s5 + $0x3c] sm:$0xf]
        %v850 = vlaneseq
        %v851 = vshrl.u32 %v850, 7
        %v852 = vsub.s32 0, %v851
        %v853 = vrot.slane %v339, %v852
        %v871 = vunpack.c.l.b16 %v833
        %v872 = vunpack.c.l.b16 %v834
        %v873 = vunpack.c.l.b16 %v835
        %v874 = vunpack.c.l.b16 %v836
        %v875 = vunpack.c.l.b16 %v837
        %v876 = vunpack.c.l.b16 %v838
        %v877 = vunpack.c.l.b16 %v839
        %v878 = vunpack.c.l.b16 %v840
        %v879 = vunpack.c.l.b16 %v841
        %v880 = vunpack.c.l.b16 %v842
        %v881 = vunpack.c.l.b16 %v843
        %v882 = vunpack.c.l.b16 %v844
        %v883 = vunpack.c.l.b16 %v845
        %v884 = vunpack.c.l.b16 %v846
        %v885 = vunpack.c.l.b16 %v847
        %v886 = vunpack.c.l.b16 %v848
        %v887 = vpack.c.b16 %v872, %v871
        %v888 = vpack.c.b16 %v874, %v873
        %v889 = vpack.c.b16 %v876, %v875
        %v890 = vpack.c.b16 %v878, %v877
        %v891 = vpack.c.b16 %v880, %v879
        %v892 = vpack.c.b16 %v882, %v881
        %v893 = vpack.c.b16 %v884, %v883
        %v894 = vpack.c.b16 %v886, %v885
        %903 = vmatprep.subr.bf16.mxu0 0
        %904 = vmatpush1.bf16.msra.mxu0 %v887
        %905 = vmatprep.subr.bf16.mxu0 0
        %906 = vmatpush1.bf16.msra.mxu0 %v888
        %907 = vmatprep.subr.bf16.mxu0 0
        %908 = vmatpush1.bf16.msra.mxu0 %v889
        %909 = vmatprep.subr.bf16.mxu0 0
        %910 = vmatpush1.bf16.msra.mxu0 %v890
        %911 = vmatprep.subr.bf16.mxu0 0
        %912 = vmatpush1.bf16.msra.mxu0 %v891
        %913 = vmatprep.subr.bf16.mxu0 0
        %914 = vmatpush1.bf16.msra.mxu0 %v892
        %915 = vmatprep.subr.bf16.mxu0 0
        %916 = vmatpush1.bf16.msra.mxu0 %v893
        %917 = vmatprep.subr.bf16.mxu0 0
        %918 = vmatpush1.bf16.msra.mxu0 %v894
        %919 = vmatprep.subr.bf16.mxu0 0
        %920 = vmatpush1.bf16.msra.mxu0 0
        %921 = vmatprep.subr.bf16.mxu0 0
        %922 = vmatpush1.bf16.msra.mxu0 0
        %923 = vmatprep.subr.bf16.mxu0 0
        %924 = vmatpush1.bf16.msra.mxu0 0
        %925 = vmatprep.subr.bf16.mxu0 0
        %926 = vmatpush1.bf16.msra.mxu0 0
        %927 = vmatprep.subr.bf16.mxu0 0
        %928 = vmatpush1.bf16.msra.mxu0 0
        %929 = vmatprep.subr.bf16.mxu0 0
        %930 = vmatpush1.bf16.msra.mxu0 0
        %931 = vmatprep.subr.bf16.mxu0 0
        %932 = vmatpush1.bf16.msra.mxu0 0
        %933 = vmatprep.subr.bf16.mxu0 0
        %934 = vmatpush1.bf16.msra.mxu0 0
        %935 = vmatprep.mubr.bf16.mxu0 0
        %936 = vmatmul.mubr.bf16.gmra.mrb[0].mxu0 %v832
        %v937 = vpop.f32.mrb[0].mxu0
        %v938 = vadd.f32 %v853, %v937
        %v939 = vpop.f32.mrb[0].mxu0
        %v940 = vpop.f32.mrb[0].mxu0
        %v941 = vadd.f32 %v853, %v940
        %v942 = vpop.f32.mrb[0].mxu0
        %943 = vdwg.mxu0
        %944 = vst.msk [vmem:[%s314] sm:$0xff] %vm365, %v938
        %945 = vst.msk [vmem:[%s314 + $0x8] sm:$0xff] %vm365, %v941
        %s946 = sand.u32 %s183, 1
        %s947 = scalar_lea.sflag [#allocation4], %s946
        %s948 = sand.u32 %s183, 1
        %s949 = smul.addr %s948, 16
        %s950 = scalar_lea.vmem [#allocation7], %s949
        // Predicated region
        $region57: #{tpu_custom_call.1} parent=47 // pred_check
          %p951 = pneg %p193
        $region58: #{tpu_custom_call.1} parent=47 // pred_check_branch
          %953 = sbr.rel (%p951) target = $region60
        $region59: #{tpu_custom_call.1} parent=47 // pred_region
          %s954 = smul.u32 2, %s23
          %s955 = ssub.s32 3, %s954
          %p956 = scmp.lt.s32.totalorder %s955, 2
          %s957 = scalar_select %p956, %s955, 2
          %s958 = smul.u32 128, %s957
          %s960 = ssub.s32 256, %s958
          %961 = vsyncadd %s947, %s960
          %p962 = scmp.ne.s32.totalorder 0, %s958
          %s963 = smul.addr %s954, 128
          %s964 = scalar_lea.hbm %s7, %s963
          %s965 = smul.u32 8, %s957
          %s966 = sshll.u32 %s950, 4
          %s967 = int_to_ptr.vmem [resolvable:$true] %s966
          %s968 = sshll.u32 %s965, 4
          %972 = dma.vmem_to_hbm [thread:$0]  (%p962), %s967, %s968, %s964, %s947, 128, 128, 8
        $region60: #{tpu_custom_call.1} parent=47 // pred_fallthru
          _
      $region48: #{tpu_custom_call.1} parent=5 // pred_fallthru
        _
      %p973 = scmp.le.s32.totalorder 2, %s18
      // Predicated region
      $region61: #{tpu_custom_call.1} parent=5 // pred_check
        %p974 = pneg %p973
      $region62: #{tpu_custom_call.1} parent=5 // pred_check_branch
        %976 = sbr.rel (%p974) target = $region64
      $region63: #{tpu_custom_call.1} parent=5 // pred_region
        %s977 = ssub.s32 %s18, 2
        // Predicated region
        $region65: #{tpu_custom_call.1} parent=63 // pred_check
          %p978 = pneg %p199
        $region66: #{tpu_custom_call.1} parent=63 // pred_check_branch
          %980 = sbr.rel (%p978) target = $region68
        $region67: #{tpu_custom_call.1} parent=63 // pred_region
          %s981 = sand.u32 %s184, 1
          %s982 = scalar_lea.sflag [#allocation4], %s981
          %s983 = sand.u32 %s184, 1
          %s984 = smul.addr %s983, 16
          %s985 = scalar_lea.vmem [#allocation7], %s984
          %986 = dma.done %s982, 256
        $region68: #{tpu_custom_call.1} parent=63 // pred_fallthru
          _
      $region64: #{tpu_custom_call.1} parent=5 // pred_fallthru
        _
    $region6: #{tpu_custom_call.1} parent=1 // loop_footer
      %s22 = sadd.s32 1, %s18
    $region7: #{tpu_custom_call.1} parent=1 // loop_footer_branch
      %17 = sbr.rel target = $region3
    $region8: #{tpu_custom_call.1} parent=1 // loop_exit
      _
    %987 = vsyncpa [#allocation3], 1
    %s988 = scalar_lea.sflag [#allocation3], 1
    %989 = vsyncpa %s988, 1
    %990 = vsyncpa [#allocation6], 1
    %991 = vsyncpa [#allocation4], 1
    %s992 = scalar_lea.sflag [#allocation4], 1
    %993 = vsyncpa %s992, 1

</llo_original>
